<compile_context>
chip_gen: v7x
topology: tpu7x:2x2x1
jax: 0.10.0
libtpu: 0.0.40
codegen_flags: <defaults>
</compile_context>

<pallas_src>
import jax
import jax.numpy as jnp
from jax.experimental import pallas as pl
from jax.experimental.pallas import tpu as pltpu


# ---------------------------------------------------------------------------
# Pallas kernel: weighted sum of a small lane vector plus a scalar bias.
# ---------------------------------------------------------------------------
def _combine_kernel(loss_ref, w_ref, bias_ref, out_ref):
    # loss_ref, w_ref : (1, N) f32 in VMEM
    # bias_ref, out_ref : (1, 1) f32 in SMEM
    out_ref[0, 0] = jnp.sum(loss_ref[...] * w_ref[...]) + bias_ref[0, 0]


def _pallas_weighted_sum(losses_2d, w_2d, bias_11):
    n = losses_2d.shape[-1]
    out = pl.pallas_call(
        _combine_kernel,
        out_shape=jax.ShapeDtypeStruct((1, 1), jnp.float32),
        in_specs=[pl.BlockSpec(memory_space=pltpu.VMEM),
                  pl.BlockSpec(memory_space=pltpu.VMEM),
                  pl.BlockSpec(memory_space=pltpu.SMEM)],
        out_specs=pl.BlockSpec(memory_space=pltpu.SMEM),
        # Tell XLA this custom call costs ~nothing so it doesn't serialize the
        # surrounding step graph around it.
        cost_estimate=pl.CostEstimate(flops=2 * n + 1,
                                      transcendentals=0,
                                      bytes_accessed=4 * (2 * n + 2)),
    )(losses_2d, w_2d, bias_11)
    return out[0, 0]


# ---------------------------------------------------------------------------
# custom_vjp so the (learned) sigmas and the task losses receive gradients.
# Backward of a weighted sum is trivial and stays in plain jnp.
# ---------------------------------------------------------------------------
@jax.custom_vjp
def _weighted_sum(losses_2d, w_2d, bias_11):
    return _pallas_weighted_sum(losses_2d, w_2d, bias_11)


def _weighted_sum_fwd(losses_2d, w_2d, bias_11):
    return _pallas_weighted_sum(losses_2d, w_2d, bias_11), (losses_2d, w_2d)


def _weighted_sum_bwd(res, g):
    losses_2d, w_2d = res
    g = jnp.asarray(g, jnp.float32)
    return (g * w_2d, g * losses_2d, jnp.reshape(g, (1, 1)))


_weighted_sum.defvjp(_weighted_sum_fwd, _weighted_sum_bwd)


# ---------------------------------------------------------------------------
# Wrapper module
# ---------------------------------------------------------------------------
class MTLLossCombinator:
    def __init__(self, num_tasks, c_type='uncertainty_weighting'):
        assert c_type in ['sum', 'uncertainty_weighting']
        self.num_tasks = num_tasks
        self.c_type = c_type
        if self.c_type == 'uncertainty_weighting':
            # deterministic init, matches nn.Parameter(torch.ones(num_tasks))
            self.sigmas = jnp.ones((num_tasks,), dtype=jnp.float32)
            # TODO(synk): for training, parameterize log_sigma instead of sigma
            # to avoid NaNs if sigma drifts <= 0 (forward semantics kept as-is).

    def __call__(self, loss_list, sigmas=None):
        # Preferred input: a single pre-stacked (num_tasks,) array (avoids N
        # tiny per-scalar HBM buffers / dispatches). A Python list of scalars
        # is still accepted for drop-in compatibility.
        if isinstance(loss_list, (list, tuple)):
            losses = jnp.stack([jnp.asarray(l, dtype=jnp.float32).reshape(())
                                for l in loss_list])
        else:
            losses = jnp.asarray(loss_list, dtype=jnp.float32).reshape(-1)
        losses_2d = losses.reshape(1, self.num_tasks)

        if self.c_type == 'sum':
            w_2d = jnp.ones((1, self.num_tasks), dtype=jnp.float32)
            bias_11 = jnp.zeros((1, 1), dtype=jnp.float32)
        else:
            s = self.sigmas if sigmas is None else sigmas
            s = jnp.asarray(s, dtype=jnp.float32).reshape(1, self.num_tasks)
            # Hoisted sigma-dependent terms: one divide + one log per task in
            # plain jnp (fused by XLA), kernel sees only a multiply-reduce.
            w_2d = 0.5 / (s * s)
            bias_11 = jnp.sum(jnp.log(s)).reshape(1, 1)

        return _weighted_sum(losses_2d, w_2d, bias_11)


# ---------------------------------------------------------------------------
# Test
# ---------------------------------------------------------------------------
if __name__ == "__main__":
    num_tasks = 4
    key = jax.random.PRNGKey(0)
    # synthetic per-task scalar losses (e.g. each produced by a task head)
    loss_vals = jax.random.uniform(key, (num_tasks,), dtype=jnp.float32) + 0.1
    loss_list = [loss_vals[i] for i in range(num_tasks)]

    # --- uncertainty weighting, list input (drop-in path) ---
    mod_uw = MTLLossCombinator(num_tasks, c_type='uncertainty_weighting')
    out_uw = jax.block_until_ready(mod_uw(loss_list))
    ref_uw = jnp.sum(0.5 * loss_vals / (mod_uw.sigmas ** 2)
                     + jnp.log(mod_uw.sigmas))
    assert jnp.allclose(out_uw, ref_uw, rtol=1e-5, atol=1e-5), (out_uw, ref_uw)

    # --- uncertainty weighting, pre-stacked input (preferred path) ---
    out_uw2 = jax.block_until_ready(mod_uw(loss_vals))
    assert jnp.allclose(out_uw2, ref_uw, rtol=1e-5, atol=1e-5), (out_uw2, ref_uw)

    # --- gradients flow to sigmas through the custom_vjp ---
    sig = jnp.full((num_tasks,), 1.3, dtype=jnp.float32)
    grad_fn = jax.grad(lambda s: mod_uw(loss_vals, sigmas=s))
    g = jax.block_until_ready(grad_fn(sig))
    g_ref = -loss_vals / sig ** 3 + 1.0 / sig
    assert jnp.allclose(g, g_ref, rtol=1e-4, atol=1e-5), (g, g_ref)

    # --- sum ---
    mod_sum = MTLLossCombinator(num_tasks, c_type='sum')
    out_sum = jax.block_until_ready(mod_sum(loss_list))
    ref_sum = jnp.sum(loss_vals)
    assert jnp.allclose(out_sum, ref_sum, rtol=1e-5, atol=1e-5), (out_sum, ref_sum)

    print("KERNEL_OK")
</pallas_src>

<mosaic_0001>
module attributes {stable_mosaic.version = 11 : i64} {
  func.func @_combine_kernel(%arg0: memref<1x4xf32, #tpu.memory_space<vmem>>, %arg1: memref<1x4xf32, #tpu.memory_space<vmem>>, %arg2: memref<1x1xf32, #tpu.memory_space<smem>>, %arg3: memref<1x1xf32, #tpu.memory_space<smem>>) attributes {dimension_semantics = [], scalar_prefetch = 0 : i64, scratch_operands = 0 : i64, tpu.core_type = #tpu.core_type<tc>} {
    %c0 = arith.constant 0 : index
    %c0_0 = arith.constant 0 : index
    %0 = vector.load %arg0[%c0, %c0_0] : memref<1x4xf32, #tpu.memory_space<vmem>>, vector<1x4xf32>
    %c0_1 = arith.constant 0 : index
    %c0_2 = arith.constant 0 : index
    %1 = vector.load %arg1[%c0_1, %c0_2] : memref<1x4xf32, #tpu.memory_space<vmem>>, vector<1x4xf32>
    %2 = arith.mulf %0, %1 : vector<1x4xf32>
    %3 = vector.shape_cast %2 : vector<1x4xf32> to vector<1x1x4xf32>
    %cst = arith.constant dense<0.000000e+00> : vector<1xf32>
    %4 = vector.multi_reduction <add>, %3, %cst [1, 2] : vector<1x1x4xf32> to vector<1xf32>
    %5 = vector.shape_cast %4 : vector<1xf32> to vector<1x1x1xf32>
    %6 = vector.extract %5[0, 0, 0] : f32 from vector<1x1x1xf32>
    %c0_3 = arith.constant 0 : index
    %c0_4 = arith.constant 0 : index
    %7 = memref.load %arg2[%c0_3, %c0_4] : memref<1x1xf32, #tpu.memory_space<smem>>
    %8 = arith.addf %6, %7 : f32
    %c0_5 = arith.constant 0 : index
    %c0_6 = arith.constant 0 : index
    %9 = memref.load %arg3[%c0_5, %c0_6] : memref<1x1xf32, #tpu.memory_space<smem>>
    memref.store %8, %arg3[%c0_5, %c0_6] : memref<1x1xf32, #tpu.memory_space<smem>>
    return
  }
}

</mosaic_0001>

<llo_original>
// kernel: tpu_custom_call.1
$region0: #{tpu_custom_call.1}
  #allocation0 [shape = 'u32[]', space=smem, size = 0x4, offset = 0x4, fixed_abs, tag = 'smem constant byte address 0x4 - core index']
  #allocation1 [shape = 'u32[144,128]{1,0:T(1,128)}', space=vmem, size = 0x12000, scoped, tag = 'internal scratch']
  #allocation2 [shape = 'f32[1,1]{1,0:T(1,128)S(6)}', space=smem, size = 0x200, scoped, tag = 'scoped memory for tpu_custom_call.1']
  %s0 = inlined_call_operand.vmem [shape: f32[1,4], index: 0, kind: input, shape index: {}]
  %s1 = inlined_call_operand.vmem [shape: f32[1,4], index: 1, kind: input, shape index: {}]
  %s2 = inlined_call_operand.<no memory space> [shape: f32[1,1], index: 2, kind: input, shape index: {}]
  %s3 = inlined_call_operand.hbm [shape: f32[1,1], index: 3, kind: output, shape index: {}]
  %s4 = sld [smem:[#allocation0]]
  $region22: #{tpu_custom_call.1} parent=0
    _
  %s6 = ssub.s32 1, %s4
  %s7 = scalar_select 0, %s6, %s4
  %8 = sst [smem:[#allocation2]] %s2
  $region1: #{tpu_custom_call.1} parent=0
    #allocation3 [shape = 'u8[512]{0}', space=smem, size = 0x200, scoped, tag = 'output window, operand 0, single buffered']
    #allocation4 [shape = 's32[1]{0}', space=sflag, size = 0x4, scoped, tag = 'scoped memory for tpu_custom_call.1']
    %9 = vsyncpa [#allocation4], 0
    // Predicated region
    $region2: #{tpu_custom_call.1} parent=1 // pred_check
      _
    $region3: #{tpu_custom_call.1} parent=1 // pred_check_branch
      %11 = sbr.rel (0) target = $region5
    $region4: #{tpu_custom_call.1} parent=1 // pred_region
      _
    $region5: #{tpu_custom_call.1} parent=1 // pred_fallthru
      _
    // Predicated region
    $region6: #{tpu_custom_call.1} parent=1 // pred_check
      _
    $region7: #{tpu_custom_call.1} parent=1 // pred_check_branch
      %13 = sbr.rel (0) target = $region9
    $region8: #{tpu_custom_call.1} parent=1 // pred_region
      _
    $region9: #{tpu_custom_call.1} parent=1 // pred_fallthru
      _
    // Predicated region
    $region10: #{tpu_custom_call.1} parent=1 // pred_check
      _
    $region11: #{tpu_custom_call.1} parent=1 // pred_check_branch
      %15 = sbr.rel (0) target = $region13
    $region12: #{tpu_custom_call.1} parent=1 // pred_region
      _
    $region13: #{tpu_custom_call.1} parent=1 // pred_fallthru
      _
    %v16 = vld [vmem:[%s0] sm:$0x1]
    %v17 = vld [vmem:[%s1] sm:$0x1]
    %v18 = vmul.f32 %v16, %v17
    %vm19 = vcmask 24576
    %v20 = vsel %vm19, %v18, 0.0
    %21 = vadd.xlane.f32.xlu0 %v20
    %v22 = vpop.xlane.xlu0 %21
    %v23 = vrot.slane %v22, 4
    %v24 = vadd.f32 %v22, %v23
    %v25 = vrot.slane %v24, 2
    %v26 = vadd.f32 %v24, %v25
    %v27 = vrot.slane %v26, 1
    %v28 = vadd.f32 %v26, %v27
    %s29 = vtos %v28
    %s30 = sld [smem:[#allocation2]]
    %s31 = sadd.f32 %s29, %s30
    %s32 = scalar_lea.smem [#allocation3], 0
    %33 = sst [smem:[%s32]] %s31
    // Predicated region
    $region14: #{tpu_custom_call.1} parent=1 // pred_check
      _
    $region15: #{tpu_custom_call.1} parent=1 // pred_check_branch
      %35 = sbr.rel (0) target = $region17
    $region16: #{tpu_custom_call.1} parent=1 // pred_region
      %s37 = ssub.s32 16, 16
      %38 = vsyncadd [#allocation4], %s37
      %41 = dma.smem_to_hbm [#allocation3], 16, %s3, [#allocation4]
    $region17: #{tpu_custom_call.1} parent=1 // pred_fallthru
      _
    // Predicated region
    $region18: #{tpu_custom_call.1} parent=1 // pred_check
      _
    $region19: #{tpu_custom_call.1} parent=1 // pred_check_branch
      %43 = sbr.rel (0) target = $region21
    $region20: #{tpu_custom_call.1} parent=1 // pred_region
      %44 = dma.done [#allocation4], 16
    $region21: #{tpu_custom_call.1} parent=1 // pred_fallthru
      _
    %45 = sfence
    %46 = vsyncpa [#allocation4], 1

</llo_original>
